<compile_context>
chip_gen: v5e
topology: v5e:2x2
jax: 0.10.0
libtpu: 0.0.40
codegen_flags: <defaults>
</compile_context>

<pallas_src>
import math

import jax
import jax.numpy as jnp
from jax.experimental import pallas as pl
from jax.experimental.pallas import tpu as pltpu

_LANE = 128


def _round_up(x, m):
    return ((x + m - 1) // m) * m


def _choose_graphs_per_step(n_graph, rows_per_graph, align, target_rows):
    """Graphs per grid step.

    bsz is kept a multiple of `align` so the output tile height
    (bsz * rows_per_graph) is sublane-aligned, unless a single full-extent
    step covers the whole batch (full-extent blocks are always legal).
    """
    bsz = max(1, target_rows // rows_per_graph)
    bsz = max(align, (bsz // align) * align)
    if bsz < n_graph:
        return bsz
    # Whole batch fits in one step.  Prefer >= 2 steps (keeps the DMA
    # double-buffer busy and lets multi-TC parts shard the "parallel" axis)
    # when that is possible without losing alignment.
    half = (((n_graph + 1) // 2) // align) * align
    if 0 < half < n_graph:
        return half
    return n_graph


def _make_kernel(n_node, f, rows, bsz, chunk_g, compute_dtype):
    """One lane-dense GEMM per ~128-row chunk + in-VMEM token/node assembly."""
    n_chunks = -(-bsz // chunk_g)

    def kernel(x_ref, w_ref, tb_ref, o_ref, y_ref):
        # x_ref : (bsz, n_node, f)   streamed activations, original layout
        # w_ref : (f, fp)            W^T, out-dim zero-padded to 128 lanes
        # tb_ref: (2, fp) float32    row 0 = graph-token, row 1 = bias (padded)
        # o_ref : (bsz*rows, fp)     flattened [token; nodes] rows per graph
        # y_ref : (chunk_g*rows, fp) f32 scratch for per-chunk row assembly
        w = w_ref[...]                       # hoisted, invariant across chunks
        tok_row = tb_ref[0:1, :]             # (1, fp) f32
        bias_row = tb_ref[1:2, :]            # (1, fp) f32
        for c in range(n_chunks):            # static unroll (small trip count)
            g0 = c * chunk_g
            gs = min(chunk_g, bsz - g0)
            r0, rs = g0 * rows, gs * rows
            # (gs, n_node, f) -> (gs*n_node, f); free when n_node % 8 == 0.
            xc = x_ref[g0:g0 + gs, :, :].reshape(gs * n_node, f)
            yc = jnp.dot(xc.astype(compute_dtype), w,
                         preferred_element_type=jnp.float32) + bias_row
            # Interleave [token; node rows] per graph in the f32 scratch
            # (32-bit masked stores at arbitrary offsets are cheap/safe).
            for j in range(gs):
                b = j * rows
                y_ref[b:b + 1, :] = tok_row
                y_ref[b + 1:b + rows, :] = yc[j * n_node:(j + 1) * n_node, :]
            # Single dense, sublane-aligned, 128-lane store to the output tile.
            o_ref[r0:r0 + rs, :] = y_ref[0:rs, :].astype(o_ref.dtype)

    return kernel


def graph_node_feature_padded(x, linear_weight, linear_bias, graph_token_weight,
                              *, compute_dtype=jnp.bfloat16, out_dtype=None,
                              target_rows=2048):
    """GraphNodeFeature forward, returning the lane-dense padded layout:
    (n_graph * (n_node + 1), 128), where row g*(n_node+1) is the graph token
    and lanes [F:128) are zero.  Preferred output for downstream fused
    consumers (avoids an output de-pad pass).

    x: (n_graph, n_node, F); linear_weight: (F, F) torch (out, in) convention;
    linear_bias: (F,); graph_token_weight: (1, F).
    """
    n_graph, n_node, f = x.shape
    rows = n_node + 1
    fp = _round_up(f, _LANE)
    out_dtype = x.dtype if out_dtype is None else jnp.dtype(out_dtype)

    # Sublane packing of the streamed output: 8 rows (f32) / 16 rows (bf16).
    sublane = max(8, 32 // jnp.dtype(out_dtype).itemsize)
    align = sublane // math.gcd(rows, sublane)

    bsz = _choose_graphs_per_step(n_graph, rows, align, target_rows)
    m_tile = bsz * rows
    m_total = n_graph * rows
    num_steps = pl.cdiv(n_graph, bsz)

    # ~128 GEMM rows per in-kernel chunk keeps intermediates small while the
    # grid step stays large for DMA amortization; chunk boundaries stay
    # sublane-aligned in output rows.
    desired_g = max(1, 128 // max(n_node, 1))
    chunk_g = min(bsz, _round_up(desired_g, align))

    # Small invariant operands (one-time wrapper cost; fetched once into VMEM
    # via constant index maps).
    w_p = jnp.pad(linear_weight.T.astype(compute_dtype),
                  ((0, 0), (0, fp - f)))                               # (f, fp)
    tok_bias = jnp.stack([graph_token_weight.reshape(-1),
                          linear_bias.reshape(-1)]).astype(jnp.float32)
    tok_bias = jnp.pad(tok_bias, ((0, 0), (0, fp - f)))                # (2, fp)

    kernel = _make_kernel(n_node, f, rows, bsz, chunk_g, compute_dtype)

    itemsize_in = jnp.dtype(x.dtype).itemsize
    itemsize_out = jnp.dtype(out_dtype).itemsize
    cost = pl.CostEstimate(
        flops=2 * n_graph * n_node * f * fp,
        transcendentals=0,
        bytes_accessed=(x.size * itemsize_in
                        + m_total * fp * itemsize_out
                        + w_p.size * jnp.dtype(compute_dtype).itemsize
                        + tok_bias.size * 4),
    )

    # VMEM use (worst case, f32, 2048-row tiles) is ~4-5 MiB: well under the
    # scoped-VMEM defaults on v5e/v6e/v7x, so vmem_limit_bytes is not set.
    return pl.pallas_call(
        kernel,
        out_shape=jax.ShapeDtypeStruct((m_total, fp), out_dtype),
        grid_spec=pltpu.PrefetchScalarGridSpec(
            num_scalar_prefetch=0,
            grid=(num_steps,),
            in_specs=[
                # x in its original 3-D layout -> no wrapper-side pad/copy pass.
                pl.BlockSpec((bsz, n_node, f), lambda i: (i, 0, 0)),
                pl.BlockSpec((f, fp), lambda i: (0, 0)),       # W^T (invariant)
                pl.BlockSpec((2, fp), lambda i: (0, 0)),       # [token; bias]
            ],
            out_specs=pl.BlockSpec((m_tile, fp), lambda i: (i, 0)),
            scratch_shapes=[pltpu.VMEM((chunk_g * rows, fp), jnp.float32)],
        ),
        compiler_params=pltpu.CompilerParams(
            dimension_semantics=("parallel",),
        ),
        cost_estimate=cost,
    )(x, w_p, tok_bias)


def graph_node_feature(x, linear_weight, linear_bias, graph_token_weight,
                       **kwargs):
    """Exact torch-shaped output (n_graph, n_node + 1, F).

    NOTE: the reshape + de-pad slice below is an extra pass over the output in
    HBM; bandwidth-sensitive callers should consume the padded 2-D layout from
    graph_node_feature_padded() directly (or fuse this slice into the consumer).
    """
    n_graph, n_node, f = x.shape
    rows = n_node + 1
    fp = _round_up(f, _LANE)
    out2d = graph_node_feature_padded(x, linear_weight, linear_bias,
                                      graph_token_weight, **kwargs)
    return out2d.reshape(n_graph, rows, fp)[:, :, :f]


def _init_params(key, hidden_dim, n_layers):
    """Deterministic synthetic init matching the module's init_params scheme."""
    f = 100  # in_features = out_features = 100
    k_w, k_tok = jax.random.split(key, 2)
    linear_std = 0.02 / math.sqrt(n_layers)
    linear_weight = linear_std * jax.random.normal(k_w, (f, f), dtype=jnp.float32)
    linear_bias = jnp.zeros((f,), dtype=jnp.float32)
    graph_token_weight = 0.02 * jax.random.normal(
        k_tok, (1, hidden_dim), dtype=jnp.float32)
    # TODO(synk): atom / in_degree / out_degree embeddings exist in __init__
    # but are unused in the forward pass, so they are not materialized here.
    return linear_weight, linear_bias, graph_token_weight


def _reference(x, linear_weight, linear_bias, graph_token_weight):
    n_graph, n_node, f = x.shape
    node = x.reshape(-1, f) @ linear_weight.T + linear_bias
    node = node.reshape(n_graph, n_node, f)
    tok = jnp.broadcast_to(graph_token_weight[None, :, :], (n_graph, 1, f))
    return jnp.concatenate([tok, node], axis=1)


if __name__ == "__main__":
    key = jax.random.PRNGKey(0)
    k_x1, k_x2, k_b2, k_params = jax.random.split(key, 4)

    # hidden_dim must equal 100 for torch.cat in forward to be valid.
    hidden_dim, n_layers, features = 100, 3, 100
    lw, lb, tok = _init_params(k_params, hidden_dim, n_layers)

    # 1) Small shape, strict f32 path (single full-extent grid step).
    x1 = jax.random.normal(k_x1, (2, 8, features), dtype=jnp.float32)
    out1 = jax.block_until_ready(
        graph_node_feature(x1, lw, lb, tok, compute_dtype=jnp.float32))
    ref1 = _reference(x1, lw, lb, tok)
    assert out1.shape == (2, 9, features), out1.shape
    err1 = float(jnp.max(jnp.abs(out1 - ref1)))
    assert err1 < 1e-4, err1

    # 2) Multi-step grid with a ragged final block, bf16 streaming/compute path
    #    (review recommendation), non-zero bias to exercise the bias add.
    x2_f32 = jax.random.normal(k_x2, (37, 8, features), dtype=jnp.float32)
    lb2 = 0.01 * jax.random.normal(k_b2, (features,), dtype=jnp.float32)
    x2 = x2_f32.astype(jnp.bfloat16)
    out2 = jax.block_until_ready(
        graph_node_feature(x2, lw, lb2, tok, target_rows=128))
    ref2 = _reference(x2_f32, lw, lb2, tok)
    assert out2.shape == (37, 9, features), out2.shape
    err2 = float(jnp.max(jnp.abs(out2.astype(jnp.float32) - ref2)))
    assert err2 < 2e-2, err2  # bf16 streaming/compute tolerance

    print("KERNEL_OK")
</pallas_src>

<mosaic_0001>
module attributes {stable_mosaic.version = 11 : i64} {
  func.func @kernel(%arg0: i32, %arg1: memref<2x8x100xf32, #tpu.memory_space<vmem>>, %arg2: memref<100x128xf32, #tpu.memory_space<vmem>>, %arg3: memref<2x128xf32, #tpu.memory_space<vmem>>, %arg4: memref<18x128xf32, #tpu.memory_space<vmem>>, %arg5: memref<18x128xf32, #tpu.memory_space<vmem>>) attributes {dimension_semantics = [#tpu.dimension_semantics<parallel>], iteration_bounds = array<i64: 1>, scalar_prefetch = 0 : i64, scratch_operands = 1 : i64, tpu.core_type = #tpu.core_type<tc>, window_params = [{transform_indices = @transform_0, window_bounds = array<i64: 2, 8, 100>}, {pipeline_mode = #tpu.pipeline_mode<synchronous>, transform_indices = @transform_1, window_bounds = array<i64: 100, 128>}, {pipeline_mode = #tpu.pipeline_mode<synchronous>, transform_indices = @transform_2, window_bounds = array<i64: 2, 128>}, {transform_indices = @transform_3, window_bounds = array<i64: 18, 128>}]} {
    %c0 = arith.constant 0 : index
    %c0_0 = arith.constant 0 : index
    %0 = vector.load %arg2[%c0, %c0_0] : memref<100x128xf32, #tpu.memory_space<vmem>>, vector<100x128xf32>
    %c0_1 = arith.constant 0 : index
    %c0_2 = arith.constant 0 : index
    %1 = vector.load %arg3[%c0_1, %c0_2] : memref<2x128xf32, #tpu.memory_space<vmem>>, vector<1x128xf32>
    %c1 = arith.constant 1 : index
    %c0_3 = arith.constant 0 : index
    %2 = vector.load %arg3[%c1, %c0_3] : memref<2x128xf32, #tpu.memory_space<vmem>>, vector<1x128xf32>
    %c0_4 = arith.constant 0 : index
    %c0_5 = arith.constant 0 : index
    %c0_6 = arith.constant 0 : index
    %3 = vector.load %arg1[%c0_4, %c0_5, %c0_6] : memref<2x8x100xf32, #tpu.memory_space<vmem>>, vector<2x8x100xf32>
    %4 = vector.shape_cast %3 : vector<2x8x100xf32> to vector<16x100xf32>
    %cst = arith.constant dense<0.000000e+00> : vector<16x128xf32>
    %5 = tpu.matmul %4, %0, %cst {dimension_numbers = #tpu.dot_dimension_numbers<[1], [0], [0], [1], [0, 0, 1, 1], [], []>} : vector<16x100xf32>, vector<100x128xf32>, vector<16x128xf32> -> vector<16x128xf32>
    %6 = vector.broadcast %2 : vector<1x128xf32> to vector<16x128xf32>
    %7 = arith.addf %5, %6 : vector<16x128xf32>
    %c0_7 = arith.constant 0 : index
    %c0_8 = arith.constant 0 : index
    %8 = vector.load %arg5[%c0_7, %c0_8] : memref<18x128xf32, #tpu.memory_space<vmem>>, vector<1x128xf32>
    tpu.vector_store %arg5[%c0_7, %c0_8], %1 {strides = array<i32>} : memref<18x128xf32, #tpu.memory_space<vmem>>, vector<1x128xf32>,
    %9 = vector.extract_strided_slice %7 {offsets = [0, 0], sizes = [8, 128], strides = [1, 1]} : vector<16x128xf32> to vector<8x128xf32>
    %c1_9 = arith.constant 1 : index
    %c0_10 = arith.constant 0 : index
    %10 = vector.load %arg5[%c1_9, %c0_10] : memref<18x128xf32, #tpu.memory_space<vmem>>, vector<8x128xf32>
    tpu.vector_store %arg5[%c1_9, %c0_10], %9 {strides = array<i32>} : memref<18x128xf32, #tpu.memory_space<vmem>>, vector<8x128xf32>,
    %c9 = arith.constant 9 : index
    %c0_11 = arith.constant 0 : index
    %11 = vector.load %arg5[%c9, %c0_11] : memref<18x128xf32, #tpu.memory_space<vmem>>, vector<1x128xf32>
    tpu.vector_store %arg5[%c9, %c0_11], %1 {strides = array<i32>} : memref<18x128xf32, #tpu.memory_space<vmem>>, vector<1x128xf32>,
    %12 = vector.extract_strided_slice %7 {offsets = [8, 0], sizes = [8, 128], strides = [1, 1]} : vector<16x128xf32> to vector<8x128xf32>
    %c10 = arith.constant 10 : index
    %c0_12 = arith.constant 0 : index
    %13 = vector.load %arg5[%c10, %c0_12] : memref<18x128xf32, #tpu.memory_space<vmem>>, vector<8x128xf32>
    tpu.vector_store %arg5[%c10, %c0_12], %12 {strides = array<i32>} : memref<18x128xf32, #tpu.memory_space<vmem>>, vector<8x128xf32>,
    %c0_13 = arith.constant 0 : index
    %c0_14 = arith.constant 0 : index
    %14 = vector.load %arg5[%c0_13, %c0_14] : memref<18x128xf32, #tpu.memory_space<vmem>>, vector<18x128xf32>
    %c0_15 = arith.constant 0 : index
    %c0_16 = arith.constant 0 : index
    %15 = vector.load %arg4[%c0_15, %c0_16] : memref<18x128xf32, #tpu.memory_space<vmem>>, vector<18x128xf32>
    tpu.vector_store %arg4[%c0_15, %c0_16], %14 {strides = array<i32>} : memref<18x128xf32, #tpu.memory_space<vmem>>, vector<18x128xf32>,
    return
  }
  func.func @transform_0(%arg0: i32) -> (i32, i32, i32) {
    %c0_i32 = arith.constant 0 : i32
    %c0_i32_0 = arith.constant 0 : i32
    %c0_i32_1 = arith.constant 0 : i32
    return %arg0, %c0_i32, %c0_i32_0 : i32, i32, i32
  }
  func.func @transform_1(%arg0: i32) -> (i32, i32) {
    %c0_i32 = arith.constant 0 : i32
    %c0_i32_0 = arith.constant 0 : i32
    %c0_i32_1 = arith.constant 0 : i32
    return %c0_i32, %c0_i32_0 : i32, i32
  }
  func.func @transform_2(%arg0: i32) -> (i32, i32) {
    %c0_i32 = arith.constant 0 : i32
    %c0_i32_0 = arith.constant 0 : i32
    %c0_i32_1 = arith.constant 0 : i32
    return %c0_i32, %c0_i32_0 : i32, i32
  }
  func.func @transform_3(%arg0: i32) -> (i32, i32) {
    %c0_i32 = arith.constant 0 : i32
    %c0_i32_0 = arith.constant 0 : i32
    return %arg0, %c0_i32 : i32, i32
  }
}

</mosaic_0001>

<llo_original>
// kernel: tpu_custom_call.1
$region0: #{tpu_custom_call.1}
  #allocation0 [shape = 'u32[]', space=smem, size = 0x4, offset = 0x4, fixed_abs, tag = 'smem constant byte address 0x4 - core index']
  #allocation1 [shape = 'u32[72,128]{1,0:T(1,128)}', space=vmem, size = 0x9000, scoped, tag = 'internal scratch']
  #allocation2 [shape = 'f32[18,128]{1,0:T(8,128)}', space=vmem, size = 0x3000, scoped, tag = 'scratch operand']
  %s0 = inlined_call_operand.hbm [shape: f32[2,8,100], index: 0, kind: input, shape index: {}]
  %s1 = inlined_call_operand.hbm [shape: f32[100,128], index: 1, kind: input, shape index: {}]
  %s2 = inlined_call_operand.hbm [shape: f32[2,128], index: 2, kind: input, shape index: {}]
  %s3 = inlined_call_operand.hbm [shape: f32[18,128], index: 3, kind: output, shape index: {}]
  %s4 = sld [smem:[#allocation0]]
  $region34: #{tpu_custom_call.1} parent=0
    _
  %s6 = ssub.s32 1, %s4
  %s7 = scalar_select 0, %s6, %s4
  $region1: #{tpu_custom_call.1} parent=0
    #allocation3 [shape = 'u8[8192]{0}', space=vmem, size = 0x2000, scoped, tag = 'input window, operand 0, single buffered']
    #allocation4 [shape = 's32[1]{0}', space=sflag, size = 0x4, scoped, tag = 'scoped memory for tpu_custom_call.1']
    #allocation5 [shape = 's32[1]{0}', space=sflag, size = 0x4, scoped, tag = 'scoped memory for tpu_custom_call.1']
    #allocation6 [shape = 'u8[53248]{0}', space=vmem, size = 0xd000, scoped, tag = 'input window, operand 1, single buffered']
    #allocation7 [shape = 's32[1]{0}', space=sflag, size = 0x4, scoped, tag = 'scoped memory for tpu_custom_call.1']
    #allocation8 [shape = 'u8[1024]{0}', space=vmem, size = 0x400, scoped, tag = 'input window, operand 2, single buffered']
    #allocation9 [shape = 'u8[12288]{0}', space=vmem, size = 0x3000, scoped, tag = 'output window, operand 0, single buffered']
    %8 = vsyncpa [#allocation4], 0
    %9 = vsyncpa [#allocation7], 0
    %10 = vsyncpa [#allocation5], 0
    // Predicated region
    $region2: #{tpu_custom_call.1} parent=1 // pred_check
      _
    $region3: #{tpu_custom_call.1} parent=1 // pred_check_branch
      %12 = sbr.rel (0) target = $region5
    $region4: #{tpu_custom_call.1} parent=1 // pred_region
      %14 = vsyncadd [#allocation4], 0
      %s15 = sshll.u32 %s0, 4
      %s16 = int_to_ptr.hbm [resolvable:$true] %s15
      %s17 = sshll.u32 [#allocation3], 4
      %s18 = int_to_ptr.vmem [resolvable:$true] %s17
      %23 = dma.hbm_to_vmem [thread:$0]  %s16, 256, %s18, [#allocation4], 128, 128, 8
    $region5: #{tpu_custom_call.1} parent=1 // pred_fallthru
      _
    // Predicated region
    $region6: #{tpu_custom_call.1} parent=1 // pred_check
      _
    $region7: #{tpu_custom_call.1} parent=1 // pred_check_branch
      %25 = sbr.rel (0) target = $region9
    $region8: #{tpu_custom_call.1} parent=1 // pred_region
      %27 = vsyncadd [#allocation7], 0
      %s28 = sshll.u32 %s1, 4
      %s29 = int_to_ptr.hbm [resolvable:$true] %s28
      %s30 = sshll.u32 [#allocation6], 4
      %s31 = int_to_ptr.vmem [resolvable:$true] %s30
      %36 = dma.hbm_to_vmem [thread:$0]  %s29, 1664, %s31, [#allocation7], 128, 128, 8
    $region9: #{tpu_custom_call.1} parent=1 // pred_fallthru
      _
    // Predicated region
    $region10: #{tpu_custom_call.1} parent=1 // pred_check
      _
    $region11: #{tpu_custom_call.1} parent=1 // pred_check_branch
      %38 = sbr.rel (0) target = $region13
    $region12: #{tpu_custom_call.1} parent=1 // pred_region
      %40 = vsyncadd [#allocation7], 0
      %s42 = sshll.u32 %s2, 4
      %s43 = int_to_ptr.hbm [resolvable:$true] %s42
      %s44 = sshll.u32 [#allocation8], 4
      %s45 = int_to_ptr.vmem [resolvable:$true] %s44
      %47 = dma.hbm_to_vmem [thread:$0]  %s43, 32, %s45, [#allocation7]
    $region13: #{tpu_custom_call.1} parent=1 // pred_fallthru
      _
    // Predicated region
    $region14: #{tpu_custom_call.1} parent=1 // pred_check
      _
    $region15: #{tpu_custom_call.1} parent=1 // pred_check_branch
      %49 = sbr.rel (0) target = $region17
    $region16: #{tpu_custom_call.1} parent=1 // pred_region
      %51 = dma.done [#allocation4], 256
    $region17: #{tpu_custom_call.1} parent=1 // pred_fallthru
      _
    // Predicated region
    $region18: #{tpu_custom_call.1} parent=1 // pred_check
      _
    $region19: #{tpu_custom_call.1} parent=1 // pred_check_branch
      %53 = sbr.rel (0) target = $region21
    $region20: #{tpu_custom_call.1} parent=1 // pred_region
      %55 = dma.done [#allocation7], 1664
    $region21: #{tpu_custom_call.1} parent=1 // pred_fallthru
      _
    // Predicated region
    $region22: #{tpu_custom_call.1} parent=1 // pred_check
      _
    $region23: #{tpu_custom_call.1} parent=1 // pred_check_branch
      %57 = sbr.rel (0) target = $region25
    $region24: #{tpu_custom_call.1} parent=1 // pred_region
      %59 = dma.done [#allocation7], 32
    $region25: #{tpu_custom_call.1} parent=1 // pred_fallthru
      _
    %v60 = vld [vmem:[#allocation6] sm:$0xff]
    %v61 = vld [vmem:[#allocation6 + $0x8] sm:$0xff]
    %v62 = vld [vmem:[#allocation6 + $0x10] sm:$0xff]
    %v63 = vld [vmem:[#allocation6 + $0x18] sm:$0xff]
    %v64 = vld [vmem:[#allocation6 + $0x20] sm:$0xff]
    %v65 = vld [vmem:[#allocation6 + $0x28] sm:$0xff]
    %v66 = vld [vmem:[#allocation6 + $0x30] sm:$0xff]
    %v67 = vld [vmem:[#allocation6 + $0x38] sm:$0xff]
    %v68 = vld [vmem:[#allocation6 + $0x40] sm:$0xff]
    %v69 = vld [vmem:[#allocation6 + $0x48] sm:$0xff]
    %v70 = vld [vmem:[#allocation6 + $0x50] sm:$0xff]
    %v71 = vld [vmem:[#allocation6 + $0x58] sm:$0xff]
    %v72 = vld [vmem:[#allocation6 + $0x60] sm:$0xf]
    %v73 = vld [vmem:[#allocation8] sm:$0x1]
    %v74 = vld [vmem:[#allocation8 + $0x1] sm:$0x1]
    %v75 = vld [vmem:[#allocation3] sm:$0xff]
    %v76 = vld [vmem:[#allocation3 + $0x8] sm:$0xff]
    %v77 = vperm.slane %v74, 0
    %vm78 = vcmask 818176
    %v80 = vsel %vm78, %v75, 0
    %v83 = vsel %vm78, %v76, 0
    %vm85 = vcmask 1043456
    %v87 = vsel %vm85, %v72, 0
    %89 = vmatpush.msra.mxu0 0.0
    %90 = vmatpush.msra.mxu0 0.0
    %91 = vmatpush.msra.mxu0 0.0
    %92 = vmatpush.msra.mxu0 %v87
    %93 = vmatpush.msra.mxu0 %v71
    %94 = vmatpush.msra.mxu0 %v70
    %95 = vmatpush.msra.mxu0 %v69
    %96 = vmatpush.msra.mxu0 %v68
    %97 = vmatpush.msra.mxu0 %v67
    %98 = vmatpush.msra.mxu0 %v66
    %99 = vmatpush.msra.mxu0 %v65
    %100 = vmatpush.msra.mxu0 %v64
    %101 = vmatpush.msra.mxu0 %v63
    %102 = vmatpush.msra.mxu0 %v62
    %103 = vmatpush.msra.mxu0 %v61
    %104 = vmatpush.msra.mxu0 %v60
    %105 = vmatmul.f32.gmra.mxu0 %v80
    %v106 = vpop.f32.mrf.mxu0
    %v107 = vadd.f32 %v77, %v106
    %108 = vmatmul.f32.gmra.mxu0 %v83
    %v109 = vpop.f32.mrf.mxu0
    %v110 = vadd.f32 %v77, %v109
    %111 = vdwg.mxu0
    %112 = vst [vmem:[#allocation2] sm:$0x1] %v73
    %113 = vst [vmem:[#allocation2 + $0x1] sm:$0xff] %v107
    %114 = vst [vmem:[#allocation2 + $0x9] sm:$0x1] %v73
    %115 = vst [vmem:[#allocation2 + $0xa] sm:$0xff] %v110
    %v116 = vld [vmem:[#allocation2] sm:$0xff]
    %v117 = vld [vmem:[#allocation2 + $0x8] sm:$0xff]
    %v118 = vld [vmem:[#allocation2 + $0x10] sm:$0x3]
    %119 = vst [vmem:[#allocation9] sm:$0xff] %v116
    %120 = vst [vmem:[#allocation9 + $0x8] sm:$0xff] %v117
    %121 = vst [vmem:[#allocation9 + $0x10] sm:$0x3] %v118
    // Predicated region
    $region26: #{tpu_custom_call.1} parent=1 // pred_check
      _
    $region27: #{tpu_custom_call.1} parent=1 // pred_check_branch
      %123 = sbr.rel (0) target = $region29
    $region28: #{tpu_custom_call.1} parent=1 // pred_region
      %125 = vsyncadd [#allocation5], 0
      %s126 = sshll.u32 [#allocation9], 4
      %s127 = int_to_ptr.vmem [resolvable:$true] %s126
      %s128 = sshll.u32 %s3, 4
      %s129 = int_to_ptr.hbm [resolvable:$true] %s128
      %134 = dma.vmem_to_hbm [thread:$0]  %s127, 384, %s129, [#allocation5], 128, 128, 8
    $region29: #{tpu_custom_call.1} parent=1 // pred_fallthru
      _
    // Predicated region
    $region30: #{tpu_custom_call.1} parent=1 // pred_check
      _
    $region31: #{tpu_custom_call.1} parent=1 // pred_check_branch
      %136 = sbr.rel (0) target = $region33
    $region32: #{tpu_custom_call.1} parent=1 // pred_region
      %138 = dma.done [#allocation5], 384
    $region33: #{tpu_custom_call.1} parent=1 // pred_fallthru
      _
    %139 = vsyncpa [#allocation4], 1
    %140 = vsyncpa [#allocation7], 1
    %141 = vsyncpa [#allocation5], 1

</llo_original>
